<compile_context>
chip_gen: v6e
topology: v6e:2x2x1
jax: 0.10.0
libtpu: 0.0.40
codegen_flags: <defaults>
</compile_context>

<pallas_src>
import jax
import jax.numpy as jnp
from jax.experimental import pallas as pl
from jax.experimental.pallas import tpu as pltpu

_EPS = 1e-8  # torch.nn.functional.cosine_similarity default eps


def _round_up(x, m):
    return ((x + m - 1) // m) * m


def _mean_normalize_kernel(pe_ref, ts_ref):
    """(TB, L, D) patch block -> (TB, D) unit-normalized mean embedding."""
    inv_l = jnp.float32(1.0 / pe_ref.shape[1])
    # f32 accumulation of the L-reduction without keeping a full f32 copy
    # of the (TB, L, D) block around.
    ts = jnp.sum(pe_ref[...], axis=1, dtype=jnp.float32) * inv_l        # (TB, D)
    nsq = jnp.sum(ts * ts, axis=1, keepdims=True)                       # (TB, 1)
    inv = jax.lax.rsqrt(jnp.maximum(nsq, jnp.float32(_EPS * _EPS)))     # EUP
    ts_ref[...] = (ts * inv).astype(ts_ref.dtype)


def _lex_normalize_kernel(lex_ref, out_ref):
    """(TV, D) lexicon block -> unit-normalized rows (eps-clamped norm)."""
    lex = lex_ref[...].astype(jnp.float32)
    nsq = jnp.sum(lex * lex, axis=1, keepdims=True)                     # (TV, 1)
    inv = jax.lax.rsqrt(jnp.maximum(nsq, jnp.float32(_EPS * _EPS)))     # EUP
    out_ref[...] = (lex * inv).astype(out_ref.dtype)


def _cosine_sim_kernel(ts_ref, lex_ref, sim_ref):
    """(TB, D) x (TV, D)^T -> (TB, TV). Operands are pre-normalized, so this
    is a plain MXU matmul with f32 accumulation."""
    sim_ref[...] = jax.lax.dot_general(
        ts_ref[...], lex_ref[...], (((1,), (1,)), ((), ())),
        preferred_element_type=jnp.float32)


def reprogramming_layer_forward(patch_embeddings, core_lexicon, k=5):
    B, L, D = patch_embeddings.shape
    V, D2 = core_lexicon.shape
    assert D == D2

    # Tile sizes: TB multiple of 8 (sublane), TV multiple of 128 (lane-dense
    # output, MXU-aligned). D (contraction axis) and L stay untiled.
    TB = min(128, _round_up(B, 8))
    TV = min(512, _round_up(V, 128))
    B_pad = _round_up(B, TB)
    V_pad = _round_up(V, TV)

    pe = patch_embeddings
    if B_pad != B:
        pe = jnp.pad(pe, ((0, B_pad - B), (0, 0), (0, 0)))
    lex = core_lexicon
    if V_pad != V:
        lex = jnp.pad(lex, ((0, V_pad - V), (0, 0)))

    vmem_cap = 32 * 1024 * 1024  # fits v5e/v6e/v7x scoped-VMEM budgets

    # 1) mean over patches + unit-normalize  ->  ts_hat (B_pad, D)
    ts_hat = pl.pallas_call(
        _mean_normalize_kernel,
        out_shape=jax.ShapeDtypeStruct((B_pad, D), patch_embeddings.dtype),
        grid=(B_pad // TB,),
        in_specs=[pl.BlockSpec((TB, L, D), lambda i: (i, 0, 0))],
        out_specs=pl.BlockSpec((TB, D), lambda i: (i, 0)),
        compiler_params=pltpu.CompilerParams(
            dimension_semantics=("parallel",), vmem_limit_bytes=vmem_cap),
    )(pe)

    # 2) unit-normalize the lexicon ONCE  ->  lex_hat (V_pad, D)
    lex_hat = pl.pallas_call(
        _lex_normalize_kernel,
        out_shape=jax.ShapeDtypeStruct((V_pad, D), core_lexicon.dtype),
        grid=(V_pad // TV,),
        in_specs=[pl.BlockSpec((TV, D), lambda i: (i, 0))],
        out_specs=pl.BlockSpec((TV, D), lambda i: (i, 0)),
        compiler_params=pltpu.CompilerParams(
            dimension_semantics=("parallel",), vmem_limit_bytes=vmem_cap),
    )(lex)

    # 3) similarity = ts_hat @ lex_hat^T, tiled (TB, TV), both axes parallel.
    sim_pad = pl.pallas_call(
        _cosine_sim_kernel,
        out_shape=jax.ShapeDtypeStruct((B_pad, V_pad), jnp.float32),
        grid=(B_pad // TB, V_pad // TV),
        in_specs=[pl.BlockSpec((TB, D), lambda i, j: (i, 0)),
                  pl.BlockSpec((TV, D), lambda i, j: (j, 0))],
        out_specs=pl.BlockSpec((TB, TV), lambda i, j: (i, j)),
        compiler_params=pltpu.CompilerParams(
            dimension_semantics=("parallel", "parallel"),
            vmem_limit_bytes=vmem_cap),
    )(ts_hat, lex_hat)

    similarity = sim_pad[:B, :V]

    # top-k selection (a sort) + index gather: plain-JAX glue around the kernels.
    _, top_k_indices = jax.lax.top_k(similarity, k)      # (B, k)
    top_k_lexicon = core_lexicon[top_k_indices]          # (B, k, D)
    return top_k_lexicon, similarity


def init_params(key, embedding_dim):
    """Deterministic init of the module's parameters.

    The PyTorch module declares a Conv1d(D, D, kernel_size=1) and an
    AdaptiveAvgPool1d(1), but neither is used in forward(). They are
    initialized here only to mirror the module's __init__.
    """
    kw, kb = jax.random.split(key)
    bound = 1.0 / jnp.sqrt(embedding_dim)
    conv_w = jax.random.uniform(kw, (embedding_dim, embedding_dim, 1),
                                minval=-bound, maxval=bound, dtype=jnp.float32)
    conv_b = jax.random.uniform(kb, (embedding_dim,),
                                minval=-bound, maxval=bound, dtype=jnp.float32)
    return {"conv1d_weight": conv_w, "conv1d_bias": conv_b}  # unused in forward


if __name__ == "__main__":
    B, L, D, V, K = 2, 8, 32, 16, 5

    key = jax.random.PRNGKey(0)
    k_pe, k_lex, k_params = jax.random.split(key, 3)

    patch_embeddings = jax.random.normal(k_pe, (B, L, D), dtype=jnp.float32)
    core_lexicon = jax.random.normal(k_lex, (V, D), dtype=jnp.float32)
    _params = init_params(k_params, D)  # declared by the module, unused in forward

    top_k_lexicon, similarity = reprogramming_layer_forward(
        patch_embeddings, core_lexicon, k=K)
    jax.block_until_ready((top_k_lexicon, similarity))

    # sanity: reference check in plain JAX (same math as the PyTorch forward)
    ts = jnp.mean(patch_embeddings, axis=1)
    num = ts @ core_lexicon.T
    den = (jnp.maximum(jnp.linalg.norm(ts, axis=1, keepdims=True), 1e-8)
           * jnp.maximum(jnp.linalg.norm(core_lexicon, axis=1), 1e-8)[None, :])
    sim_ref = num / den
    assert similarity.shape == (B, V)
    assert top_k_lexicon.shape == (B, K, D)
    assert jnp.allclose(similarity, sim_ref, atol=1e-5, rtol=1e-5)

    print("KERNEL_OK")
</pallas_src>

<mosaic_0001>
module attributes {stable_mosaic.version = 11 : i64} {
  func.func @_mean_normalize_kernel(%arg0: i32, %arg1: memref<8x8x32xf32, #tpu.memory_space<vmem>>, %arg2: memref<8x32xf32, #tpu.memory_space<vmem>>) attributes {dimension_semantics = [#tpu.dimension_semantics<parallel>], iteration_bounds = array<i64: 1>, scalar_prefetch = 0 : i64, scratch_operands = 0 : i64, tpu.core_type = #tpu.core_type<tc>, window_params = [{transform_indices = @transform_0, window_bounds = array<i64: 8, 8, 32>}, {transform_indices = @transform_1, window_bounds = array<i64: 8, 32>}]} {
    %c0 = arith.constant 0 : index
    %c0_0 = arith.constant 0 : index
    %c0_1 = arith.constant 0 : index
    %0 = vector.load %arg1[%c0, %c0_0, %c0_1] : memref<8x8x32xf32, #tpu.memory_space<vmem>>, vector<8x8x32xf32>
    %cst = arith.constant dense<0.000000e+00> : vector<8x32xf32>
    %1 = vector.multi_reduction <add>, %0, %cst [1] : vector<8x8x32xf32> to vector<8x32xf32>
    %cst_2 = arith.constant 1.250000e-01 : f32
    %2 = vector.broadcast %cst_2 : f32 to vector<8x32xf32>
    %3 = arith.mulf %1, %2 : vector<8x32xf32>
    %4 = arith.mulf %3, %3 : vector<8x32xf32>
    %cst_3 = arith.constant dense<0.000000e+00> : vector<8xf32>
    %5 = vector.multi_reduction <add>, %4, %cst_3 [1] : vector<8x32xf32> to vector<8xf32>
    %6 = vector.shape_cast %5 : vector<8xf32> to vector<8x1xf32>
    %cst_4 = arith.constant 1.000000e-16 : f32
    %7 = vector.broadcast %cst_4 : f32 to vector<8x1xf32>
    %8 = arith.maximumf %6, %7 : vector<8x1xf32>
    %9 = math.rsqrt %8 : vector<8x1xf32>
    %10 = vector.broadcast %9 : vector<8x1xf32> to vector<8x32xf32>
    %11 = arith.mulf %3, %10 : vector<8x32xf32>
    %c0_5 = arith.constant 0 : index
    %c0_6 = arith.constant 0 : index
    %12 = vector.load %arg2[%c0_5, %c0_6] : memref<8x32xf32, #tpu.memory_space<vmem>>, vector<8x32xf32>
    tpu.vector_store %arg2[%c0_5, %c0_6], %11 {strides = array<i32>} : memref<8x32xf32, #tpu.memory_space<vmem>>, vector<8x32xf32>,
    return
  }
  func.func @transform_0(%arg0: i32) -> (i32, i32, i32) {
    %c0_i32 = arith.constant 0 : i32
    %c0_i32_0 = arith.constant 0 : i32
    %c0_i32_1 = arith.constant 0 : i32
    return %arg0, %c0_i32, %c0_i32_0 : i32, i32, i32
  }
  func.func @transform_1(%arg0: i32) -> (i32, i32) {
    %c0_i32 = arith.constant 0 : i32
    %c0_i32_0 = arith.constant 0 : i32
    return %arg0, %c0_i32 : i32, i32
  }
}

</mosaic_0001>

<llo_original>
// kernel: tpu_custom_call.1
$region0: #{tpu_custom_call.1}
  #allocation0 [shape = 'u32[]', space=smem, size = 0x4, offset = 0x4, fixed_abs, tag = 'smem constant byte address 0x4 - core index']
  #allocation1 [shape = 'u32[144,128]{1,0:T(1,128)}', space=vmem, size = 0x12000, scoped, tag = 'internal scratch']
  %s0 = inlined_call_operand.hbm [shape: f32[8,8,32], index: 0, kind: input, shape index: {}]
  %s1 = inlined_call_operand.hbm [shape: f32[8,32], index: 1, kind: output, shape index: {}]
  %s2 = sld [smem:[#allocation0]]
  $region18: #{tpu_custom_call.1} parent=0
    _
  %s4 = ssub.s32 1, %s2
  %s5 = scalar_select 0, %s4, %s2
  $region1: #{tpu_custom_call.1} parent=0
    #allocation2 [shape = 'u8[32768]{0}', space=vmem, size = 0x8000, scoped, tag = 'input window, operand 0, single buffered']
    #allocation3 [shape = 's32[1]{0}', space=sflag, size = 0x4, scoped, tag = 'scoped memory for tpu_custom_call.1']
    #allocation4 [shape = 's32[1]{0}', space=sflag, size = 0x4, scoped, tag = 'scoped memory for tpu_custom_call.1']
    #allocation5 [shape = 'u8[4096]{0}', space=vmem, size = 0x1000, scoped, tag = 'output window, operand 0, single buffered']
    %6 = vsyncpa [#allocation3], 0
    %7 = vsyncpa [#allocation4], 0
    // Predicated region
    $region2: #{tpu_custom_call.1} parent=1 // pred_check
      _
    $region3: #{tpu_custom_call.1} parent=1 // pred_check_branch
      %9 = sbr.rel (0) target = $region5
    $region4: #{tpu_custom_call.1} parent=1 // pred_region
      %s11 = ssub.s32 1024, 1024
      %12 = vsyncadd [#allocation3], %s11
      %s13 = sshll.u32 [#allocation2], 4
      %s14 = int_to_ptr.vmem [resolvable:$true] %s13
      %19 = dma.hbm_to_vmem [thread:$0]  %s0, 1024, %s14, [#allocation3], 128, 128, 8
    $region5: #{tpu_custom_call.1} parent=1 // pred_fallthru
      _
    // Predicated region
    $region6: #{tpu_custom_call.1} parent=1 // pred_check
      _
    $region7: #{tpu_custom_call.1} parent=1 // pred_check_branch
      %21 = sbr.rel (0) target = $region9
    $region8: #{tpu_custom_call.1} parent=1 // pred_region
      %22 = dma.done [#allocation3], 1024
    $region9: #{tpu_custom_call.1} parent=1 // pred_fallthru
      _
    %v23 = vld [vmem:[#allocation2] sm:$0xff]
    %v24 = vld [vmem:[#allocation2 + $0x8] sm:$0xff]
    %v25 = vld [vmem:[#allocation2 + $0x10] sm:$0xff]
    %v26 = vld [vmem:[#allocation2 + $0x18] sm:$0xff]
    %v27 = vld [vmem:[#allocation2 + $0x20] sm:$0xff]
    %v28 = vld [vmem:[#allocation2 + $0x28] sm:$0xff]
    %v29 = vld [vmem:[#allocation2 + $0x30] sm:$0xff]
    %v30 = vld [vmem:[#allocation2 + $0x38] sm:$0xff]
    %vm31 = vcmask 261120
    %v32 = vsel %vm31, %v23, 0.0
    %v33 = vrot.slane %v32, 4
    %v34 = vadd.f32 %v32, %v33
    %v35 = vrot.slane %v34, 2
    %v36 = vadd.f32 %v34, %v35
    %v37 = vrot.slane %v36, 1
    %v38 = vadd.f32 %v36, %v37
    %v39 = vsel %vm31, %v24, 0.0
    %v40 = vrot.slane %v39, 4
    %v41 = vadd.f32 %v39, %v40
    %v42 = vrot.slane %v41, 2
    %v43 = vadd.f32 %v41, %v42
    %v44 = vrot.slane %v43, 1
    %v45 = vadd.f32 %v43, %v44
    %v46 = vsel %vm31, %v25, 0.0
    %v47 = vrot.slane %v46, 4
    %v48 = vadd.f32 %v46, %v47
    %v49 = vrot.slane %v48, 2
    %v50 = vadd.f32 %v48, %v49
    %v51 = vrot.slane %v50, 1
    %v52 = vadd.f32 %v50, %v51
    %v53 = vsel %vm31, %v26, 0.0
    %v54 = vrot.slane %v53, 4
    %v55 = vadd.f32 %v53, %v54
    %v56 = vrot.slane %v55, 2
    %v57 = vadd.f32 %v55, %v56
    %v58 = vrot.slane %v57, 1
    %v59 = vadd.f32 %v57, %v58
    %v60 = vsel %vm31, %v27, 0.0
    %v61 = vrot.slane %v60, 4
    %v62 = vadd.f32 %v60, %v61
    %v63 = vrot.slane %v62, 2
    %v64 = vadd.f32 %v62, %v63
    %v65 = vrot.slane %v64, 1
    %v66 = vadd.f32 %v64, %v65
    %v67 = vsel %vm31, %v28, 0.0
    %v68 = vrot.slane %v67, 4
    %v69 = vadd.f32 %v67, %v68
    %v70 = vrot.slane %v69, 2
    %v71 = vadd.f32 %v69, %v70
    %v72 = vrot.slane %v71, 1
    %v73 = vadd.f32 %v71, %v72
    %v74 = vsel %vm31, %v29, 0.0
    %v75 = vrot.slane %v74, 4
    %v76 = vadd.f32 %v74, %v75
    %v77 = vrot.slane %v76, 2
    %v78 = vadd.f32 %v76, %v77
    %v79 = vrot.slane %v78, 1
    %v80 = vadd.f32 %v78, %v79
    %v81 = vsel %vm31, %v30, 0.0
    %v82 = vrot.slane %v81, 4
    %v83 = vadd.f32 %v81, %v82
    %v84 = vrot.slane %v83, 2
    %v85 = vadd.f32 %v83, %v84
    %v86 = vrot.slane %v85, 1
    %v87 = vadd.f32 %v85, %v86
    %v88 = vmul.f32 %v38, 0.125
    %v89 = vmul.f32 %v45, 0.125
    %v90 = vmul.f32 %v52, 0.125
    %v91 = vmul.f32 %v59, 0.125
    %v92 = vmul.f32 %v66, 0.125
    %v93 = vmul.f32 %v73, 0.125
    %v94 = vmul.f32 %v80, 0.125
    %v95 = vmul.f32 %v87, 0.125
    %v96 = vmul.f32 %v88, %v88
    %v97 = vmul.f32 %v89, %v89
    %v98 = vmul.f32 %v90, %v90
    %v99 = vmul.f32 %v91, %v91
    %v100 = vmul.f32 %v92, %v92
    %v101 = vmul.f32 %v93, %v93
    %v102 = vmul.f32 %v94, %v94
    %v103 = vmul.f32 %v95, %v95
    %vm112 = vcmask 1041409
    %v113 = vsel %vm112, %v97, %v96
    %vm114 = vcmask 1042434
    %v115 = vsel %vm114, %v98, %v113
    %vm116 = vcmask 1043459
    %v117 = vsel %vm116, %v99, %v115
    %vm118 = vcmask 1044484
    %v119 = vsel %vm118, %v100, %v117
    %vm120 = vcmask 1045509
    %v121 = vsel %vm120, %v101, %v119
    %vm122 = vcmask 1046534
    %v123 = vsel %vm122, %v102, %v121
    %vm124 = vcmask 1047559
    %v125 = vsel %vm124, %v103, %v123
    %v127 = vsel %vm31, %v125, 0.0
    %128 = vadd.xlane.f32.xlu0 %v127
    %v129 = vpop.xlane.xlu0 %128
    %v130 = vmax.f32 %v129, 1e-16
    %v131 = vrsqrt.pop %v130
    %v133 = vrot.slane %v131, 1
    %v134 = vrot.slane %v131, 2
    %v135 = vrot.slane %v131, 3
    %v136 = vrot.slane %v131, 4
    %v137 = vrot.slane %v131, 5
    %v138 = vrot.slane %v131, 6
    %v139 = vrot.slane %v131, 7
    %v148 = vmul.f32 %v88, %v131
    %v149 = vmul.f32 %v89, %v133
    %v150 = vmul.f32 %v90, %v134
    %v151 = vmul.f32 %v91, %v135
    %v152 = vmul.f32 %v92, %v136
    %v153 = vmul.f32 %v93, %v137
    %v154 = vmul.f32 %v94, %v138
    %v155 = vmul.f32 %v95, %v139
    %v164 = vrot.slane %v149, 7
    %v165 = vsel %vm112, %v164, %v148
    %v166 = vrot.slane %v150, 6
    %v167 = vsel %vm114, %v166, %v165
    %v168 = vrot.slane %v151, 5
    %v169 = vsel %vm116, %v168, %v167
    %v170 = vrot.slane %v152, 4
    %v171 = vsel %vm118, %v170, %v169
    %v172 = vrot.slane %v153, 3
    %v173 = vsel %vm120, %v172, %v171
    %v174 = vrot.slane %v154, 2
    %v175 = vsel %vm122, %v174, %v173
    %v176 = vrot.slane %v155, 1
    %v177 = vsel %vm124, %v176, %v175
    %179 = vst.msk [vmem:[#allocation5] sm:$0xff] %vm31, %v177
    // Predicated region
    $region10: #{tpu_custom_call.1} parent=1 // pred_check
      _
    $region11: #{tpu_custom_call.1} parent=1 // pred_check_branch
      %181 = sbr.rel (0) target = $region13
    $region12: #{tpu_custom_call.1} parent=1 // pred_region
      %s183 = ssub.s32 128, 128
      %184 = vsyncadd [#allocation4], %s183
      %s186 = sshll.u32 [#allocation5], 4
      %s187 = int_to_ptr.vmem [resolvable:$true] %s186
      %189 = dma.vmem_to_hbm [thread:$0]  %s187, 128, %s1, [#allocation4]
    $region13: #{tpu_custom_call.1} parent=1 // pred_fallthru
      _
    // Predicated region
    $region14: #{tpu_custom_call.1} parent=1 // pred_check
      _
    $region15: #{tpu_custom_call.1} parent=1 // pred_check_branch
      %191 = sbr.rel (0) target = $region17
    $region16: #{tpu_custom_call.1} parent=1 // pred_region
      %192 = dma.done [#allocation4], 128
    $region17: #{tpu_custom_call.1} parent=1 // pred_fallthru
      _
    %193 = vsyncpa [#allocation3], 1
    %194 = vsyncpa [#allocation4], 1

</llo_original>
